<compile_context>
chip_gen: v7x
topology: tpu7x:2x2x1
jax: 0.10.0
libtpu: 0.0.40
codegen_flags: <defaults>
</compile_context>

<pallas_src>
import functools
import math

import jax
import jax.numpy as jnp
from jax.experimental import pallas as pl
from jax.experimental.pallas import tpu as pltpu

_LANE = 128
_SUBLANE = 8


def _round_up(x, m):
    return (x + m - 1) // m * m


@functools.lru_cache(maxsize=None)
def _batch_tile_cap():
    """512-row tiles on 128-MiB-VMEM parts (v5e/v6e), 256 on v7x / unknown."""
    try:
        if pltpu.get_tpu_info().vmem_capacity_bytes >= (100 << 20):
            return 512
    except Exception:
        pass
    return 256


def _pick_batch_tile(B):
    if B < 2 * _SUBLANE:
        # Single full block; block_shape == full array dim is always legal.
        return B
    # Aim for >=2 grid steps so the "parallel" axis can shard across both
    # v7x TensorCores, while capping per-step VMEM.
    return min(_round_up(pl.cdiv(B, 2), _SUBLANE), _batch_tile_cap())


# ----------------------------- Pallas kernel --------------------------------

def _decoder_fc_kernel(n_chunks, *refs):
    """Fused concat + Linear + Sigmoid + value-range rescale.

    refs = (range_ref, x_0..x_{n-1}, w_0..w_{n-1}, b_ref, o_ref)
      range_ref : SMEM (2,)   f32   -> (scale, shift) = (vmax - vmin, vmin)
      x_i       : VMEM (TB, D_i)    flattened features of decoded layer i
      w_i       : VMEM (D_i, Np) bf16  weight chunk (N zero-padded to 128)
      b_ref     : VMEM (1, Np)   f32   bias (N zero-padded to 128)
      o_ref     : VMEM (TB, Np)  f32
    """
    range_ref = refs[0]
    x_refs = refs[1:1 + n_chunks]
    w_refs = refs[1 + n_chunks:1 + 2 * n_chunks]
    b_ref = refs[1 + 2 * n_chunks]
    o_ref = refs[2 + 2 * n_chunks]

    # y = concat(x_0..x_{n-1}) @ W + b, computed as a sum of per-chunk matmuls
    # on the MXU with f32 accumulation.
    y = b_ref[...].astype(jnp.float32)                      # (1, Np) broadcasts
    for x_ref, w_ref in zip(x_refs, w_refs):
        x = x_ref[...]
        if x.dtype == jnp.float32:
            # Trace-time branch: only narrows if a caller fed f32 activations.
            x = x.astype(jnp.bfloat16)
        y = y + jnp.dot(x, w_ref[...], preferred_element_type=jnp.float32)

    # output_fn = Sigmoid (EUP), then value-range affine rescale (VPU).
    scale = range_ref[0]
    shift = range_ref[1]
    o_ref[...] = (jax.nn.sigmoid(y) * scale + shift).astype(o_ref.dtype)


def decoder_fc_pallas(x_chunks, w_chunks, b_pad, scale_shift):
    """x_chunks: list of (B, D_i) [bf16 preferred]; w_chunks: list of
    (D_i, Np) bf16; b_pad: (1, Np) f32; scale_shift: (2,) f32.
    Returns (B, Np) f32 (caller slices [:, :n_out])."""
    n_chunks = len(x_chunks)
    B = x_chunks[0].shape[0]
    Np = w_chunks[0].shape[1]

    TB = _pick_batch_tile(B)
    grid = (pl.cdiv(B, TB),)   # ragged last block; no jnp.pad HBM pass

    def call(single_buffer_consts):
        if single_buffer_consts:
            # Grid-invariant weights/bias: single-buffer to reclaim the
            # pointless second VMEM copy (matters inside v7x's 64 MiB budget).
            def const_spec(shape):
                return pl.BlockSpec(shape, lambda i: (0, 0),
                                    pipeline_mode=pl.Buffered(1))
        else:
            def const_spec(shape):
                return pl.BlockSpec(shape, lambda i: (0, 0))

        in_specs = [pl.BlockSpec(memory_space=pltpu.MemorySpace.SMEM)]  # scale/shift
        in_specs += [pl.BlockSpec((TB, x.shape[1]), lambda i: (i, 0))
                     for x in x_chunks]
        in_specs += [const_spec((w.shape[0], Np)) for w in w_chunks]
        in_specs += [const_spec((1, Np))]                               # bias

        return pl.pallas_call(
            functools.partial(_decoder_fc_kernel, n_chunks),
            out_shape=jax.ShapeDtypeStruct((B, Np), jnp.float32),
            grid=grid,
            in_specs=in_specs,
            out_specs=pl.BlockSpec((TB, Np), lambda i: (i, 0)),
            compiler_params=pltpu.CompilerParams(
                dimension_semantics=("parallel",)),
        )(scale_shift, *x_chunks, *w_chunks, b_pad)

    try:
        return call(True)
    except Exception:
        # Fallback for jax versions / lowerings without Buffered(1) support.
        return call(False)


# ----------------------------- Module wrapper --------------------------------

class Decoder1DPallas:
    """JAX/Pallas port of Decoder_1D.

    # TODO(synk): output_fn is fixed to Sigmoid; an arbitrary user-supplied
    # nn.Module output_fn would need its own lowering.
    """

    def __init__(self, decoder_layers, input_channels, n_output_channels,
                 value_range, key):
        self.decoder_layers = list(decoder_layers)
        self.value_range = value_range
        self.n_output_channels = n_output_channels
        self.chunk_dims = [(32 // 2 ** l) ** 2 * input_channels[l]
                           for l in self.decoder_layers]
        D = sum(self.chunk_dims)
        # Lane-dense N (padded to 128, NOT 256 — kernel is memory-bound).
        Np = _round_up(max(n_output_channels, 1), _LANE)
        self.n_out_pad = Np

        # Deterministic init mirroring nn.Linear's U(-1/sqrt(D), 1/sqrt(D)).
        kw, kb = jax.random.split(key)
        bound = 1.0 / math.sqrt(D)
        # torch stores weight as (N, D); we keep the f32 master as (D, N).
        self.w = jax.random.uniform(kw, (D, n_output_channels), jnp.float32,
                                    -bound, bound)
        self.b = jax.random.uniform(kb, (n_output_channels,), jnp.float32,
                                    -bound, bound)

        # Kernel-side params: bf16 weights, split into one chunk per decoded
        # layer so the concat folds into the kernel.
        w_pad = jnp.zeros((D, Np), jnp.float32).at[:, :n_output_channels].set(self.w)
        self.w_chunks = []
        off = 0
        for d in self.chunk_dims:
            self.w_chunks.append(w_pad[off:off + d].astype(jnp.bfloat16))
            off += d
        self.b_pad = jnp.zeros((1, Np), jnp.float32).at[0, :n_output_channels].set(self.b)

        if value_range is None:
            scale, shift = 1.0, 0.0
        else:
            scale, shift = value_range[1] - value_range[0], value_range[0]
        self.scale_shift = jnp.asarray([scale, shift], jnp.float32)

    def __call__(self, R_pile):
        B = R_pile[self.decoder_layers[0]].shape[0]
        # flatten(start_dim=1) per selected layer, kept in its NATIVE dtype
        # (no forced f32 upcast); the concat is fused into the kernel.
        x_chunks = [R_pile[l].reshape(B, -1) for l in self.decoder_layers]
        out = decoder_fc_pallas(x_chunks, self.w_chunks, self.b_pad,
                                self.scale_shift)
        return out[:, :self.n_output_channels]

    def reference(self, R_pile):
        """Plain-JAX f32 reference matching the PyTorch forward."""
        B = R_pile[self.decoder_layers[0]].shape[0]
        x = jnp.concatenate([R_pile[l].reshape(B, -1)
                             for l in self.decoder_layers],
                            axis=1).astype(jnp.float32)
        y = jax.nn.sigmoid(x @ self.w + self.b)
        if self.value_range is not None:
            lo, hi = self.value_range
            y = y * (hi - lo) + lo
        return y


# ----------------------------------- main ------------------------------------

if __name__ == "__main__":
    root = jax.random.PRNGKey(0)
    k_params, k_small, k_big = jax.random.split(root, 3)

    input_channels = [3, 8, 4, 8]          # channels per PredNet layer
    decoder_layers = [2, 3]                # decode from layers 2 and 3
    n_output_channels = 8
    value_range = (-1.0, 1.0)

    dec = Decoder1DPallas(decoder_layers, input_channels, n_output_channels,
                          value_range, k_params)

    def make_R_pile(batch, key):
        ks = jax.random.split(key, len(input_channels))
        pile = []
        for l, c in enumerate(input_channels):
            s = 32 // 2 ** l
            # Producer emits bf16 directly (perf review: bf16 activations halve
            # the HBM-bound read; no standalone convert pass anywhere).
            pile.append(jax.random.normal(ks[l], (batch, c, s, s),
                                          jnp.bfloat16))
        return pile

    # batch=2: single full block (grid=1).  batch=20: two grid steps with a
    # ragged last block — exercises the no-pad cdiv path.
    for batch, kk in ((2, k_small), (20, k_big)):
        R_pile = make_R_pile(batch, kk)
        out = jax.block_until_ready(dec(R_pile))
        ref = dec.reference(R_pile)
        assert out.shape == (batch, n_output_channels)
        # Tolerance for bf16 MXU operands (f32 accumulation), D = 384.
        assert jnp.allclose(out, ref, atol=2e-2, rtol=0.0), \
            "mismatch vs reference (B=%d)" % batch

    print("KERNEL_OK")
</pallas_src>

<mosaic_0001>
module attributes {stable_mosaic.version = 11 : i64} {
  func.func @_decoder_fc_kernel(%arg0: i32, %arg1: memref<2xf32, #tpu.memory_space<smem>>, %arg2: memref<2x256xbf16, #tpu.memory_space<vmem>>, %arg3: memref<2x128xbf16, #tpu.memory_space<vmem>>, %arg4: memref<256x128xbf16, #tpu.memory_space<vmem>>, %arg5: memref<128x128xbf16, #tpu.memory_space<vmem>>, %arg6: memref<1x128xf32, #tpu.memory_space<vmem>>, %arg7: memref<2x128xf32, #tpu.memory_space<vmem>>) attributes {dimension_semantics = [#tpu.dimension_semantics<parallel>], iteration_bounds = array<i64: 1>, scalar_prefetch = 0 : i64, scratch_operands = 0 : i64, tpu.core_type = #tpu.core_type<tc>, window_params = [{transform_indices = @transform_0, window_bounds = array<i64: 2>}, {transform_indices = @transform_1, window_bounds = array<i64: 2, 256>}, {transform_indices = @transform_2, window_bounds = array<i64: 2, 128>}, {pipeline_mode = #tpu.pipeline_mode<synchronous>, transform_indices = @transform_3, window_bounds = array<i64: 256, 128>}, {pipeline_mode = #tpu.pipeline_mode<synchronous>, transform_indices = @transform_4, window_bounds = array<i64: 128, 128>}, {pipeline_mode = #tpu.pipeline_mode<synchronous>, transform_indices = @transform_5, window_bounds = array<i64: 1, 128>}, {transform_indices = @transform_6, window_bounds = array<i64: 2, 128>}]} {
    %c0 = arith.constant 0 : index
    %c0_0 = arith.constant 0 : index
    %0 = vector.load %arg6[%c0, %c0_0] : memref<1x128xf32, #tpu.memory_space<vmem>>, vector<1x128xf32>
    %c0_1 = arith.constant 0 : index
    %c0_2 = arith.constant 0 : index
    %1 = vector.load %arg2[%c0_1, %c0_2] : memref<2x256xbf16, #tpu.memory_space<vmem>>, vector<2x256xbf16>
    %c0_3 = arith.constant 0 : index
    %c0_4 = arith.constant 0 : index
    %2 = vector.load %arg4[%c0_3, %c0_4] : memref<256x128xbf16, #tpu.memory_space<vmem>>, vector<256x128xbf16>
    %cst = arith.constant dense<0.000000e+00> : vector<2x128xf32>
    %3 = tpu.matmul %1, %2, %cst {dimension_numbers = #tpu.dot_dimension_numbers<[1], [0], [0], [1], [0, 0, 1, 1], [], []>} : vector<2x256xbf16>, vector<256x128xbf16>, vector<2x128xf32> -> vector<2x128xf32>
    %4 = vector.broadcast %0 : vector<1x128xf32> to vector<2x128xf32>
    %5 = arith.addf %4, %3 : vector<2x128xf32>
    %c0_5 = arith.constant 0 : index
    %c0_6 = arith.constant 0 : index
    %6 = vector.load %arg3[%c0_5, %c0_6] : memref<2x128xbf16, #tpu.memory_space<vmem>>, vector<2x128xbf16>
    %c0_7 = arith.constant 0 : index
    %c0_8 = arith.constant 0 : index
    %7 = vector.load %arg5[%c0_7, %c0_8] : memref<128x128xbf16, #tpu.memory_space<vmem>>, vector<128x128xbf16>
    %cst_9 = arith.constant dense<0.000000e+00> : vector<2x128xf32>
    %8 = tpu.matmul %6, %7, %cst_9 {dimension_numbers = #tpu.dot_dimension_numbers<[1], [0], [0], [1], [0, 0, 1, 1], [], []>} : vector<2x128xbf16>, vector<128x128xbf16>, vector<2x128xf32> -> vector<2x128xf32>
    %9 = arith.addf %5, %8 : vector<2x128xf32>
    %c0_10 = arith.constant 0 : index
    %10 = memref.load %arg1[%c0_10] : memref<2xf32, #tpu.memory_space<smem>>
    %c1 = arith.constant 1 : index
    %11 = memref.load %arg1[%c1] : memref<2xf32, #tpu.memory_space<smem>>
    %12 = arith.negf %9 : vector<2x128xf32>
    %13 = math.exp %12 : vector<2x128xf32>
    %cst_11 = arith.constant 1.000000e+00 : f32
    %14 = vector.broadcast %cst_11 : f32 to vector<2x128xf32>
    %15 = arith.addf %14, %13 : vector<2x128xf32>
    %16 = arith.divf %14, %15 : vector<2x128xf32>
    %17 = vector.broadcast %10 : f32 to vector<2x128xf32>
    %18 = arith.mulf %16, %17 : vector<2x128xf32>
    %19 = vector.broadcast %11 : f32 to vector<2x128xf32>
    %20 = arith.addf %18, %19 : vector<2x128xf32>
    %c0_12 = arith.constant 0 : index
    %c0_13 = arith.constant 0 : index
    %21 = vector.load %arg7[%c0_12, %c0_13] : memref<2x128xf32, #tpu.memory_space<vmem>>, vector<2x128xf32>
    tpu.vector_store %arg7[%c0_12, %c0_13], %20 {strides = array<i32>} : memref<2x128xf32, #tpu.memory_space<vmem>>, vector<2x128xf32>,
    return
  }
  func.func @transform_0(%arg0: i32) -> i32 {
    %c0_i32 = arith.constant 0 : i32
    %c0_i32_0 = arith.constant 0 : i32
    return %c0_i32 : i32
  }
  func.func @transform_1(%arg0: i32) -> (i32, i32) {
    %c0_i32 = arith.constant 0 : i32
    %c0_i32_0 = arith.constant 0 : i32
    return %arg0, %c0_i32 : i32, i32
  }
  func.func @transform_2(%arg0: i32) -> (i32, i32) {
    %c0_i32 = arith.constant 0 : i32
    %c0_i32_0 = arith.constant 0 : i32
    return %arg0, %c0_i32 : i32, i32
  }
  func.func @transform_3(%arg0: i32) -> (i32, i32) {
    %c0_i32 = arith.constant 0 : i32
    %c0_i32_0 = arith.constant 0 : i32
    %c0_i32_1 = arith.constant 0 : i32
    return %c0_i32, %c0_i32_0 : i32, i32
  }
  func.func @transform_4(%arg0: i32) -> (i32, i32) {
    %c0_i32 = arith.constant 0 : i32
    %c0_i32_0 = arith.constant 0 : i32
    %c0_i32_1 = arith.constant 0 : i32
    return %c0_i32, %c0_i32_0 : i32, i32
  }
  func.func @transform_5(%arg0: i32) -> (i32, i32) {
    %c0_i32 = arith.constant 0 : i32
    %c0_i32_0 = arith.constant 0 : i32
    %c0_i32_1 = arith.constant 0 : i32
    return %c0_i32, %c0_i32_0 : i32, i32
  }
  func.func @transform_6(%arg0: i32) -> (i32, i32) {
    %c0_i32 = arith.constant 0 : i32
    %c0_i32_0 = arith.constant 0 : i32
    return %arg0, %c0_i32 : i32, i32
  }
}

module attributes {stable_mosaic.version = 11 : i64} {
  func.func @_decoder_fc_kernel(%arg0: i32, %arg1: memref<2xf32, #tpu.memory_space<smem>>, %arg2: memref<2x256xbf16, #tpu.memory_space<vmem>>, %arg3: memref<2x128xbf16, #tpu.memory_space<vmem>>, %arg4: memref<256x128xbf16, #tpu.memory_space<vmem>>, %arg5: memref<128x128xbf16, #tpu.memory_space<vmem>>, %arg6: memref<1x128xf32, #tpu.memory_space<vmem>>, %arg7: memref<2x128xf32, #tpu.memory_space<vmem>>) attributes {dimension_semantics = [#tpu.dimension_semantics<parallel>], iteration_bounds = array<i64: 1>, scalar_prefetch = 0 : i64, scratch_operands = 0 : i64, tpu.core_type = #tpu.core_type<tc>, window_params = [{transform_indices = @transform_0, window_bounds = array<i64: 2>}, {transform_indices = @transform_1, window_bounds = array<i64: 2, 256>}, {transform_indices = @transform_2, window_bounds = array<i64: 2, 128>}, {pipeline_mode = #tpu.pipeline_mode<synchronous>, transform_indices = @transform_3, window_bounds = array<i64: 256, 128>}, {pipeline_mode = #tpu.pipeline_mode<synchronous>, transform_indices = @transform_4, window_bounds = array<i64: 128, 128>}, {pipeline_mode = #tpu.pipeline_mode<synchronous>, transform_indices = @transform_5, window_bounds = array<i64: 1, 128>}, {transform_indices = @transform_6, window_bounds = array<i64: 2, 128>}]} {
    %c0 = arith.constant 0 : index
    %c0_0 = arith.constant 0 : index
    %0 = vector.load %arg6[%c0, %c0_0] : memref<1x128xf32, #tpu.memory_space<vmem>>, vector<1x128xf32>
    %c0_1 = arith.constant 0 : index
    %c0_2 = arith.constant 0 : index
    %1 = vector.load %arg2[%c0_1, %c0_2] : memref<2x256xbf16, #tpu.memory_space<vmem>>, vector<2x256xbf16>
    %c0_3 = arith.constant 0 : index
    %c0_4 = arith.constant 0 : index
    %2 = vector.load %arg4[%c0_3, %c0_4] : memref<256x128xbf16, #tpu.memory_space<vmem>>, vector<256x128xbf16>
    %cst = arith.constant dense<0.000000e+00> : vector<2x128xf32>
    %3 = tpu.matmul %1, %2, %cst {dimension_numbers = #tpu.dot_dimension_numbers<[1], [0], [0], [1], [0, 0, 1, 1], [], []>} : vector<2x256xbf16>, vector<256x128xbf16>, vector<2x128xf32> -> vector<2x128xf32>
    %4 = vector.broadcast %0 : vector<1x128xf32> to vector<2x128xf32>
    %5 = arith.addf %4, %3 : vector<2x128xf32>
    %c0_5 = arith.constant 0 : index
    %c0_6 = arith.constant 0 : index
    %6 = vector.load %arg3[%c0_5, %c0_6] : memref<2x128xbf16, #tpu.memory_space<vmem>>, vector<2x128xbf16>
    %c0_7 = arith.constant 0 : index
    %c0_8 = arith.constant 0 : index
    %7 = vector.load %arg5[%c0_7, %c0_8] : memref<128x128xbf16, #tpu.memory_space<vmem>>, vector<128x128xbf16>
    %cst_9 = arith.constant dense<0.000000e+00> : vector<2x128xf32>
    %8 = tpu.matmul %6, %7, %cst_9 {dimension_numbers = #tpu.dot_dimension_numbers<[1], [0], [0], [1], [0, 0, 1, 1], [], []>} : vector<2x128xbf16>, vector<128x128xbf16>, vector<2x128xf32> -> vector<2x128xf32>
    %9 = arith.addf %5, %8 : vector<2x128xf32>
    %c0_10 = arith.constant 0 : index
    %10 = memref.load %arg1[%c0_10] : memref<2xf32, #tpu.memory_space<smem>>
    %c1 = arith.constant 1 : index
    %11 = memref.load %arg1[%c1] : memref<2xf32, #tpu.memory_space<smem>>
    %12 = arith.negf %9 : vector<2x128xf32>
    %13 = math.exp %12 : vector<2x128xf32>
    %cst_11 = arith.constant 1.000000e+00 : f32
    %14 = vector.broadcast %cst_11 : f32 to vector<2x128xf32>
    %15 = arith.addf %14, %13 : vector<2x128xf32>
    %16 = arith.divf %14, %15 : vector<2x128xf32>
    %17 = vector.broadcast %10 : f32 to vector<2x128xf32>
    %18 = arith.mulf %16, %17 : vector<2x128xf32>
    %19 = vector.broadcast %11 : f32 to vector<2x128xf32>
    %20 = arith.addf %18, %19 : vector<2x128xf32>
    %c0_12 = arith.constant 0 : index
    %c0_13 = arith.constant 0 : index
    %21 = vector.load %arg7[%c0_12, %c0_13] : memref<2x128xf32, #tpu.memory_space<vmem>>, vector<2x128xf32>
    tpu.vector_store %arg7[%c0_12, %c0_13], %20 {strides = array<i32>} : memref<2x128xf32, #tpu.memory_space<vmem>>, vector<2x128xf32>,
    return
  }
  func.func @transform_0(%arg0: i32) -> i32 {
    %c0_i32 = arith.constant 0 : i32
    %c0_i32_0 = arith.constant 0 : i32
    return %c0_i32 : i32
  }
  func.func @transform_1(%arg0: i32) -> (i32, i32) {
    %c0_i32 = arith.constant 0 : i32
    %c0_i32_0 = arith.constant 0 : i32
    return %arg0, %c0_i32 : i32, i32
  }
  func.func @transform_2(%arg0: i32) -> (i32, i32) {
    %c0_i32 = arith.constant 0 : i32
    %c0_i32_0 = arith.constant 0 : i32
    return %arg0, %c0_i32 : i32, i32
  }
  func.func @transform_3(%arg0: i32) -> (i32, i32) {
    %c0_i32 = arith.constant 0 : i32
    %c0_i32_0 = arith.constant 0 : i32
    %c0_i32_1 = arith.constant 0 : i32
    return %c0_i32, %c0_i32_0 : i32, i32
  }
  func.func @transform_4(%arg0: i32) -> (i32, i32) {
    %c0_i32 = arith.constant 0 : i32
    %c0_i32_0 = arith.constant 0 : i32
    %c0_i32_1 = arith.constant 0 : i32
    return %c0_i32, %c0_i32_0 : i32, i32
  }
  func.func @transform_5(%arg0: i32) -> (i32, i32) {
    %c0_i32 = arith.constant 0 : i32
    %c0_i32_0 = arith.constant 0 : i32
    %c0_i32_1 = arith.constant 0 : i32
    return %c0_i32, %c0_i32_0 : i32, i32
  }
  func.func @transform_6(%arg0: i32) -> (i32, i32) {
    %c0_i32 = arith.constant 0 : i32
    %c0_i32_0 = arith.constant 0 : i32
    return %arg0, %c0_i32 : i32, i32
  }
}

</mosaic_0001>

<llo_original>
// kernel: tpu_custom_call.1
$region0: #{tpu_custom_call.1}
  #allocation0 [shape = 'u32[]', space=smem, size = 0x4, offset = 0x4, fixed_abs, tag = 'smem constant byte address 0x4 - core index']
  #allocation1 [shape = 'u32[144,128]{1,0:T(1,128)}', space=vmem, size = 0x12000, scoped, tag = 'internal scratch']
  %s0 = inlined_call_operand.hbm [shape: f32[2], index: 0, kind: input, shape index: {}]
  %s1 = inlined_call_operand.vmem [shape: bf16[2,256], index: 1, kind: input, shape index: {}]
  %s2 = inlined_call_operand.vmem [shape: bf16[2,128], index: 2, kind: input, shape index: {}]
  %s3 = inlined_call_operand.hbm [shape: bf16[256,128], index: 3, kind: input, shape index: {}]
  %s4 = inlined_call_operand.hbm [shape: bf16[128,128], index: 4, kind: input, shape index: {}]
  %s5 = inlined_call_operand.vmem [shape: f32[1,128], index: 5, kind: input, shape index: {}]
  %s6 = inlined_call_operand.hbm [shape: f32[2,128], index: 6, kind: output, shape index: {}]
  %s7 = sld [smem:[#allocation0]]
  $region46: #{tpu_custom_call.1} parent=0
    _
  %s9 = ssub.s32 1, %s7
  %s10 = scalar_select 0, %s9, %s7
  $region1: #{tpu_custom_call.1} parent=0
    #allocation2 [shape = 'u8[512]{0}', space=smem, size = 0x200, scoped, tag = 'input window, operand 0, single buffered']
    #allocation3 [shape = 's32[1]{0}', space=sflag, size = 0x4, scoped, tag = 'scoped memory for tpu_custom_call.1']
    #allocation4 [shape = 's32[1]{0}', space=sflag, size = 0x4, scoped, tag = 'scoped memory for tpu_custom_call.1']
    #allocation5 [shape = 's32[1]{0}', space=sflag, size = 0x4, scoped, tag = 'scoped memory for tpu_custom_call.1']
    #allocation6 [shape = 'u8[65536]{0}', space=vmem, size = 0x10000, scoped, tag = 'input window, operand 3, single buffered']
    #allocation7 [shape = 'u8[32768]{0}', space=vmem, size = 0x8000, scoped, tag = 'input window, operand 4, single buffered']
    #allocation8 [shape = 's32[1]{0}', space=sflag, size = 0x4, scoped, tag = 'scoped memory for tpu_custom_call.1']
    #allocation9 [shape = 'u8[1024]{0}', space=vmem, size = 0x400, scoped, tag = 'output window, operand 0, single buffered']
    %11 = vsyncpa [#allocation5], 0
    %12 = vsyncpa [#allocation3], 0
    %13 = vsyncpa [#allocation8], 0
    %14 = vsyncpa [#allocation4], 0
    // Predicated region
    $region2: #{tpu_custom_call.1} parent=1 // pred_check
      _
    $region3: #{tpu_custom_call.1} parent=1 // pred_check_branch
      %16 = sbr.rel (0) target = $region5
    $region4: #{tpu_custom_call.1} parent=1 // pred_region
      %s18 = ssub.s32 16, 16
      %19 = vsyncadd [#allocation5], %s18
      %22 = dma.hbm_to_smem %s0, 16, [#allocation2], [#allocation5]
    $region5: #{tpu_custom_call.1} parent=1 // pred_fallthru
      _
    // Predicated region
    $region6: #{tpu_custom_call.1} parent=1 // pred_check
      _
    $region7: #{tpu_custom_call.1} parent=1 // pred_check_branch
      %24 = sbr.rel (0) target = $region9
    $region8: #{tpu_custom_call.1} parent=1 // pred_region
      _
    $region9: #{tpu_custom_call.1} parent=1 // pred_fallthru
      _
    // Predicated region
    $region10: #{tpu_custom_call.1} parent=1 // pred_check
      _
    $region11: #{tpu_custom_call.1} parent=1 // pred_check_branch
      %26 = sbr.rel (0) target = $region13
    $region12: #{tpu_custom_call.1} parent=1 // pred_region
      _
    $region13: #{tpu_custom_call.1} parent=1 // pred_fallthru
      _
    // Predicated region
    $region14: #{tpu_custom_call.1} parent=1 // pred_check
      _
    $region15: #{tpu_custom_call.1} parent=1 // pred_check_branch
      %28 = sbr.rel (0) target = $region17
    $region16: #{tpu_custom_call.1} parent=1 // pred_region
      %s30 = ssub.s32 2048, 2048
      %31 = vsyncadd [#allocation3], %s30
      %s32 = sshll.u32 [#allocation6], 4
      %s33 = int_to_ptr.vmem [resolvable:$true] %s32
      %38 = dma.hbm_to_vmem [thread:$0]  %s3, 2048, %s33, [#allocation3], 64, 64, 4
    $region17: #{tpu_custom_call.1} parent=1 // pred_fallthru
      _
    // Predicated region
    $region18: #{tpu_custom_call.1} parent=1 // pred_check
      _
    $region19: #{tpu_custom_call.1} parent=1 // pred_check_branch
      %40 = sbr.rel (0) target = $region21
    $region20: #{tpu_custom_call.1} parent=1 // pred_region
      %s42 = ssub.s32 1024, 1024
      %43 = vsyncadd [#allocation8], %s42
      %s44 = sshll.u32 [#allocation7], 4
      %s45 = int_to_ptr.vmem [resolvable:$true] %s44
      %50 = dma.hbm_to_vmem [thread:$0]  %s4, 1024, %s45, [#allocation8], 64, 64, 4
    $region21: #{tpu_custom_call.1} parent=1 // pred_fallthru
      _
    // Predicated region
    $region22: #{tpu_custom_call.1} parent=1 // pred_check
      _
    $region23: #{tpu_custom_call.1} parent=1 // pred_check_branch
      %52 = sbr.rel (0) target = $region25
    $region24: #{tpu_custom_call.1} parent=1 // pred_region
      _
    $region25: #{tpu_custom_call.1} parent=1 // pred_fallthru
      _
    // Predicated region
    $region26: #{tpu_custom_call.1} parent=1 // pred_check
      _
    $region27: #{tpu_custom_call.1} parent=1 // pred_check_branch
      %54 = sbr.rel (0) target = $region29
    $region28: #{tpu_custom_call.1} parent=1 // pred_region
      %55 = dma.done [#allocation5], 16
    $region29: #{tpu_custom_call.1} parent=1 // pred_fallthru
      _
    // Predicated region
    $region30: #{tpu_custom_call.1} parent=1 // pred_check
      _
    $region31: #{tpu_custom_call.1} parent=1 // pred_check_branch
      %57 = sbr.rel (0) target = $region33
    $region32: #{tpu_custom_call.1} parent=1 // pred_region
      %58 = dma.done [#allocation3], 2048
    $region33: #{tpu_custom_call.1} parent=1 // pred_fallthru
      _
    // Predicated region
    $region34: #{tpu_custom_call.1} parent=1 // pred_check
      _
    $region35: #{tpu_custom_call.1} parent=1 // pred_check_branch
      %60 = sbr.rel (0) target = $region37
    $region36: #{tpu_custom_call.1} parent=1 // pred_region
      %61 = dma.done [#allocation8], 1024
    $region37: #{tpu_custom_call.1} parent=1 // pred_fallthru
      _
    %62 = sfence
    %v64 = vld [vmem:[%s5] sm:$0x1]
    %v65 = vld [vmem:[%s1] sm:$0x3]
    %v66 = vld [vmem:[#allocation6] sm:$0xf]
    %v67 = vld [vmem:[#allocation6 + $0x4] sm:$0xf]
    %v68 = vld [vmem:[#allocation6 + $0x8] sm:$0xf]
    %v69 = vld [vmem:[#allocation6 + $0xc] sm:$0xf]
    %v70 = vld [vmem:[#allocation6 + $0x10] sm:$0xf]
    %v71 = vld [vmem:[#allocation6 + $0x14] sm:$0xf]
    %v72 = vld [vmem:[#allocation6 + $0x18] sm:$0xf]
    %v73 = vld [vmem:[#allocation6 + $0x1c] sm:$0xf]
    %v74 = vld [vmem:[#allocation6 + $0x20] sm:$0xf]
    %v75 = vld [vmem:[#allocation6 + $0x24] sm:$0xf]
    %v76 = vld [vmem:[#allocation6 + $0x28] sm:$0xf]
    %v77 = vld [vmem:[#allocation6 + $0x2c] sm:$0xf]
    %v78 = vld [vmem:[#allocation6 + $0x30] sm:$0xf]
    %v79 = vld [vmem:[#allocation6 + $0x34] sm:$0xf]
    %v80 = vld [vmem:[#allocation6 + $0x38] sm:$0xf]
    %v81 = vld [vmem:[#allocation6 + $0x3c] sm:$0xf]
    %v82 = vld [vmem:[#allocation6 + $0x40] sm:$0xf]
    %v83 = vld [vmem:[#allocation6 + $0x44] sm:$0xf]
    %v84 = vld [vmem:[#allocation6 + $0x48] sm:$0xf]
    %v85 = vld [vmem:[#allocation6 + $0x4c] sm:$0xf]
    %v86 = vld [vmem:[#allocation6 + $0x50] sm:$0xf]
    %v87 = vld [vmem:[#allocation6 + $0x54] sm:$0xf]
    %v88 = vld [vmem:[#allocation6 + $0x58] sm:$0xf]
    %v89 = vld [vmem:[#allocation6 + $0x5c] sm:$0xf]
    %v90 = vld [vmem:[#allocation6 + $0x60] sm:$0xf]
    %v91 = vld [vmem:[#allocation6 + $0x64] sm:$0xf]
    %v92 = vld [vmem:[#allocation6 + $0x68] sm:$0xf]
    %v93 = vld [vmem:[#allocation6 + $0x6c] sm:$0xf]
    %v94 = vld [vmem:[#allocation6 + $0x70] sm:$0xf]
    %v95 = vld [vmem:[#allocation6 + $0x74] sm:$0xf]
    %v96 = vld [vmem:[#allocation6 + $0x78] sm:$0xf]
    %v97 = vld [vmem:[#allocation6 + $0x7c] sm:$0xf]
    %v100 = vunpack.c.l.s4 1966171168
    %v101 = vunpack.c.0.s8 %v100
    %v102 = vlaneseq
    %v103 = vshrl.u32 %v102, 7
    %v104 = vsub.s32 %v101, %v103
    %v105 = vrot.slane %v65, %v104
    %v106 = vcombine.high %v105, %v105
    %v108 = vunpack.c.l.s4 1966171168
    %v109 = vunpack.c.0.s8 %v108
    %v110 = vlaneseq
    %v111 = vshrl.u32 %v110, 7
    %v112 = vsub.s32 %v109, %v111
    %v113 = vrot.slane %v105, %v112
    %v115 = vunpack.c.l.s4 1966171168
    %v116 = vunpack.c.0.s8 %v115
    %v117 = vlaneseq
    %v118 = vshrl.u32 %v117, 7
    %v119 = vsub.s32 %v116, %v118
    %v120 = vrot.slane %v106, %v119
    %v155 = vunpack.c.l.b16 %v66
    %v156 = vunpack.c.l.b16 %v67
    %v157 = vunpack.c.l.b16 %v68
    %v158 = vunpack.c.l.b16 %v69
    %v159 = vunpack.c.l.b16 %v70
    %v160 = vunpack.c.l.b16 %v71
    %v161 = vunpack.c.l.b16 %v72
    %v162 = vunpack.c.l.b16 %v73
    %v163 = vunpack.c.l.b16 %v74
    %v164 = vunpack.c.l.b16 %v75
    %v165 = vunpack.c.l.b16 %v76
    %v166 = vunpack.c.l.b16 %v77
    %v167 = vunpack.c.l.b16 %v78
    %v168 = vunpack.c.l.b16 %v79
    %v169 = vunpack.c.l.b16 %v80
    %v170 = vunpack.c.l.b16 %v81
    %v171 = vunpack.c.l.b16 %v82
    %v172 = vunpack.c.l.b16 %v83
    %v173 = vunpack.c.l.b16 %v84
    %v174 = vunpack.c.l.b16 %v85
    %v175 = vunpack.c.l.b16 %v86
    %v176 = vunpack.c.l.b16 %v87
    %v177 = vunpack.c.l.b16 %v88
    %v178 = vunpack.c.l.b16 %v89
    %v179 = vunpack.c.l.b16 %v90
    %v180 = vunpack.c.l.b16 %v91
    %v181 = vunpack.c.l.b16 %v92
    %v182 = vunpack.c.l.b16 %v93
    %v183 = vunpack.c.l.b16 %v94
    %v184 = vunpack.c.l.b16 %v95
    %v185 = vunpack.c.l.b16 %v96
    %v186 = vunpack.c.l.b16 %v97
    %v187 = vpack.c.b16 %v156, %v155
    %v188 = vpack.c.b16 %v158, %v157
    %v189 = vpack.c.b16 %v160, %v159
    %v190 = vpack.c.b16 %v162, %v161
    %v191 = vpack.c.b16 %v164, %v163
    %v192 = vpack.c.b16 %v166, %v165
    %v193 = vpack.c.b16 %v168, %v167
    %v194 = vpack.c.b16 %v170, %v169
    %v195 = vpack.c.b16 %v172, %v171
    %v196 = vpack.c.b16 %v174, %v173
    %v197 = vpack.c.b16 %v176, %v175
    %v198 = vpack.c.b16 %v178, %v177
    %v199 = vpack.c.b16 %v180, %v179
    %v200 = vpack.c.b16 %v182, %v181
    %v201 = vpack.c.b16 %v184, %v183
    %v202 = vpack.c.b16 %v186, %v185
    %219 = vmatprep.subr.bf16.mxu0 0
    %220 = vmatpush1.bf16.msra.mxu0 %v187
    %221 = vmatprep.subr.bf16.mxu0 0
    %222 = vmatpush1.bf16.msra.mxu0 %v188
    %223 = vmatprep.subr.bf16.mxu0 0
    %224 = vmatpush1.bf16.msra.mxu0 %v189
    %225 = vmatprep.subr.bf16.mxu0 0
    %226 = vmatpush1.bf16.msra.mxu0 %v190
    %227 = vmatprep.subr.bf16.mxu0 0
    %228 = vmatpush1.bf16.msra.mxu0 %v191
    %229 = vmatprep.subr.bf16.mxu0 0
    %230 = vmatpush1.bf16.msra.mxu0 %v192
    %231 = vmatprep.subr.bf16.mxu0 0
    %232 = vmatpush1.bf16.msra.mxu0 %v193
    %233 = vmatprep.subr.bf16.mxu0 0
    %234 = vmatpush1.bf16.msra.mxu0 %v194
    %235 = vmatprep.subr.bf16.mxu0 0
    %236 = vmatpush1.bf16.msra.mxu0 %v195
    %237 = vmatprep.subr.bf16.mxu0 0
    %238 = vmatpush1.bf16.msra.mxu0 %v196
    %239 = vmatprep.subr.bf16.mxu0 0
    %240 = vmatpush1.bf16.msra.mxu0 %v197
    %241 = vmatprep.subr.bf16.mxu0 0
    %242 = vmatpush1.bf16.msra.mxu0 %v198
    %243 = vmatprep.subr.bf16.mxu0 0
    %244 = vmatpush1.bf16.msra.mxu0 %v199
    %245 = vmatprep.subr.bf16.mxu0 0
    %246 = vmatpush1.bf16.msra.mxu0 %v200
    %247 = vmatprep.subr.bf16.mxu0 0
    %248 = vmatpush1.bf16.msra.mxu0 %v201
    %249 = vmatprep.subr.bf16.mxu0 0
    %250 = vmatpush1.bf16.msra.mxu0 %v202
    %251 = vmatprep.mubr.bf16.mxu0 %v120
    %252 = vmatmul.mubr.bf16.gmra.mrb[0].mxu0 %v113
    %v253 = vpop.f32.mrb[0].mxu0
    %v254 = vadd.f32 0.0, %v253
    %v255 = vpop.f32.mrb[0].mxu0
    %v256 = vpop.f32.mrb[0].mxu0
    %v257 = vpop.f32.mrb[0].mxu0
    %258 = vdwg.mxu0
    %v260 = vlaneseq
    %v261 = vshrl.u32 %v260, 7
    %v262 = vsub.s32 0, %v261
    %v263 = vrot.slane %v64, %v262
    %v265 = vadd.f32 %v263, %v254
    %v266 = vld [vmem:[%s2] sm:$0x1]
    %v267 = vld [vmem:[#allocation7] sm:$0xf]
    %v268 = vld [vmem:[#allocation7 + $0x4] sm:$0xf]
    %v269 = vld [vmem:[#allocation7 + $0x8] sm:$0xf]
    %v270 = vld [vmem:[#allocation7 + $0xc] sm:$0xf]
    %v271 = vld [vmem:[#allocation7 + $0x10] sm:$0xf]
    %v272 = vld [vmem:[#allocation7 + $0x14] sm:$0xf]
    %v273 = vld [vmem:[#allocation7 + $0x18] sm:$0xf]
    %v274 = vld [vmem:[#allocation7 + $0x1c] sm:$0xf]
    %v275 = vld [vmem:[#allocation7 + $0x20] sm:$0xf]
    %v276 = vld [vmem:[#allocation7 + $0x24] sm:$0xf]
    %v277 = vld [vmem:[#allocation7 + $0x28] sm:$0xf]
    %v278 = vld [vmem:[#allocation7 + $0x2c] sm:$0xf]
    %v279 = vld [vmem:[#allocation7 + $0x30] sm:$0xf]
    %v280 = vld [vmem:[#allocation7 + $0x34] sm:$0xf]
    %v281 = vld [vmem:[#allocation7 + $0x38] sm:$0xf]
    %v282 = vld [vmem:[#allocation7 + $0x3c] sm:$0xf]
    %v299 = vunpack.c.l.b16 %v267
    %v300 = vunpack.c.l.b16 %v268
    %v301 = vunpack.c.l.b16 %v269
    %v302 = vunpack.c.l.b16 %v270
    %v303 = vunpack.c.l.b16 %v271
    %v304 = vunpack.c.l.b16 %v272
    %v305 = vunpack.c.l.b16 %v273
    %v306 = vunpack.c.l.b16 %v274
    %v307 = vunpack.c.l.b16 %v275
    %v308 = vunpack.c.l.b16 %v276
    %v309 = vunpack.c.l.b16 %v277
    %v310 = vunpack.c.l.b16 %v278
    %v311 = vunpack.c.l.b16 %v279
    %v312 = vunpack.c.l.b16 %v280
    %v313 = vunpack.c.l.b16 %v281
    %v314 = vunpack.c.l.b16 %v282
    %v315 = vpack.c.b16 %v300, %v299
    %v316 = vpack.c.b16 %v302, %v301
    %v317 = vpack.c.b16 %v304, %v303
    %v318 = vpack.c.b16 %v306, %v305
    %v319 = vpack.c.b16 %v308, %v307
    %v320 = vpack.c.b16 %v310, %v309
    %v321 = vpack.c.b16 %v312, %v311
    %v322 = vpack.c.b16 %v314, %v313
    %331 = vmatprep.subr.bf16.mxu0 0
    %332 = vmatpush1.bf16.msra.mxu0 %v315
    %333 = vmatprep.subr.bf16.mxu0 0
    %334 = vmatpush1.bf16.msra.mxu0 %v316
    %335 = vmatprep.subr.bf16.mxu0 0
    %336 = vmatpush1.bf16.msra.mxu0 %v317
    %337 = vmatprep.subr.bf16.mxu0 0
    %338 = vmatpush1.bf16.msra.mxu0 %v318
    %339 = vmatprep.subr.bf16.mxu0 0
    %340 = vmatpush1.bf16.msra.mxu0 %v319
    %341 = vmatprep.subr.bf16.mxu0 0
    %342 = vmatpush1.bf16.msra.mxu0 %v320
    %343 = vmatprep.subr.bf16.mxu0 0
    %344 = vmatpush1.bf16.msra.mxu0 %v321
    %345 = vmatprep.subr.bf16.mxu0 0
    %346 = vmatpush1.bf16.msra.mxu0 %v322
    %347 = vmatprep.subr.bf16.mxu0 0
    %348 = vmatpush1.bf16.msra.mxu0 0
    %349 = vmatprep.subr.bf16.mxu0 0
    %350 = vmatpush1.bf16.msra.mxu0 0
    %351 = vmatprep.subr.bf16.mxu0 0
    %352 = vmatpush1.bf16.msra.mxu0 0
    %353 = vmatprep.subr.bf16.mxu0 0
    %354 = vmatpush1.bf16.msra.mxu0 0
    %355 = vmatprep.subr.bf16.mxu0 0
    %356 = vmatpush1.bf16.msra.mxu0 0
    %357 = vmatprep.subr.bf16.mxu0 0
    %358 = vmatpush1.bf16.msra.mxu0 0
    %359 = vmatprep.subr.bf16.mxu0 0
    %360 = vmatpush1.bf16.msra.mxu0 0
    %361 = vmatprep.subr.bf16.mxu0 0
    %362 = vmatpush1.bf16.msra.mxu0 0
    %363 = vmatprep.mubr.bf16.mxu0 0
    %364 = vmatmul.mubr.bf16.gmra.mrb[0].mxu0 %v266
    %v365 = vpop.f32.mrb[0].mxu0
    %v366 = vadd.f32 0.0, %v365
    %v367 = vpop.f32.mrb[0].mxu0
    %v368 = vpop.f32.mrb[0].mxu0
    %v369 = vpop.f32.mrb[0].mxu0
    %370 = vdwg.mxu0
    %v371 = vadd.f32 %v265, %v366
    %s372 = sld [smem:[#allocation2]]
    %s373 = sld [smem:[#allocation2 + $0x1]]
    %v374 = vxor.u32 %v371, 2147483648
    %v375 = vmul.f32 %v374, 1.442695
    %v376 = vpow.pop %v375
    %v377 = vadd.f32 %v376, 1.0
    %v378 = vrcp.pop %v377
    %v379 = vmul.f32 1.0, %v378
    %v380 = vstv %s372
    %v381 = vmul.f32 %v379, %v380
    %v382 = vstv %s373
    %v383 = vadd.f32 %v381, %v382
    %384 = vst [vmem:[#allocation9] sm:$0x3] %v383
    // Predicated region
    $region38: #{tpu_custom_call.1} parent=1 // pred_check
      _
    $region39: #{tpu_custom_call.1} parent=1 // pred_check_branch
      %386 = sbr.rel (0) target = $region41
    $region40: #{tpu_custom_call.1} parent=1 // pred_region
      %s388 = ssub.s32 32, 32
      %389 = vsyncadd [#allocation4], %s388
      %s391 = sshll.u32 [#allocation9], 4
      %s392 = int_to_ptr.vmem [resolvable:$true] %s391
      %394 = dma.vmem_to_hbm [thread:$0]  %s392, 32, %s6, [#allocation4]
    $region41: #{tpu_custom_call.1} parent=1 // pred_fallthru
      _
    // Predicated region
    $region42: #{tpu_custom_call.1} parent=1 // pred_check
      _
    $region43: #{tpu_custom_call.1} parent=1 // pred_check_branch
      %396 = sbr.rel (0) target = $region45
    $region44: #{tpu_custom_call.1} parent=1 // pred_region
      %397 = dma.done [#allocation4], 32
    $region45: #{tpu_custom_call.1} parent=1 // pred_fallthru
      _
    %398 = vsyncpa [#allocation3], 1
    %399 = vsyncpa [#allocation8], 1
    %400 = vsyncpa [#allocation4], 1
    %401 = vsyncpa [#allocation5], 1

// kernel: tpu_custom_call.1
$region0: #{tpu_custom_call.1}
  #allocation0 [shape = 'u32[]', space=smem, size = 0x4, offset = 0x4, fixed_abs, tag = 'smem constant byte address 0x4 - core index']
  #allocation1 [shape = 'u32[144,128]{1,0:T(1,128)}', space=vmem, size = 0x12000, scoped, tag = 'internal scratch']
  %s0 = inlined_call_operand.hbm [shape: f32[2], index: 0, kind: input, shape index: {}]
  %s1 = inlined_call_operand.vmem [shape: bf16[2,256], index: 1, kind: input, shape index: {}]
  %s2 = inlined_call_operand.vmem [shape: bf16[2,128], index: 2, kind: input, shape index: {}]
  %s3 = inlined_call_operand.hbm [shape: bf16[256,128], index: 3, kind: input, shape index: {}]
  %s4 = inlined_call_operand.hbm [shape: bf16[128,128], index: 4, kind: input, shape index: {}]
  %s5 = inlined_call_operand.vmem [shape: f32[1,128], index: 5, kind: input, shape index: {}]
  %s6 = inlined_call_operand.hbm [shape: f32[2,128], index: 6, kind: output, shape index: {}]
  %s7 = sld [smem:[#allocation0]]
  $region46: #{tpu_custom_call.1} parent=0
    _
  %s9 = ssub.s32 1, %s7
  %s10 = scalar_select 0, %s9, %s7
  $region1: #{tpu_custom_call.1} parent=0
    #allocation2 [shape = 'u8[512]{0}', space=smem, size = 0x200, scoped, tag = 'input window, operand 0, single buffered']
    #allocation3 [shape = 's32[1]{0}', space=sflag, size = 0x4, scoped, tag = 'scoped memory for tpu_custom_call.1']
    #allocation4 [shape = 's32[1]{0}', space=sflag, size = 0x4, scoped, tag = 'scoped memory for tpu_custom_call.1']
    #allocation5 [shape = 's32[1]{0}', space=sflag, size = 0x4, scoped, tag = 'scoped memory for tpu_custom_call.1']
    #allocation6 [shape = 'u8[65536]{0}', space=vmem, size = 0x10000, scoped, tag = 'input window, operand 3, single buffered']
    #allocation7 [shape = 'u8[32768]{0}', space=vmem, size = 0x8000, scoped, tag = 'input window, operand 4, single buffered']
    #allocation8 [shape = 's32[1]{0}', space=sflag, size = 0x4, scoped, tag = 'scoped memory for tpu_custom_call.1']
    #allocation9 [shape = 'u8[1024]{0}', space=vmem, size = 0x400, scoped, tag = 'output window, operand 0, single buffered']
    %11 = vsyncpa [#allocation5], 0
    %12 = vsyncpa [#allocation3], 0
    %13 = vsyncpa [#allocation8], 0
    %14 = vsyncpa [#allocation4], 0
    // Predicated region
    $region2: #{tpu_custom_call.1} parent=1 // pred_check
      _
    $region3: #{tpu_custom_call.1} parent=1 // pred_check_branch
      %16 = sbr.rel (0) target = $region5
    $region4: #{tpu_custom_call.1} parent=1 // pred_region
      %s18 = ssub.s32 16, 16
      %19 = vsyncadd [#allocation5], %s18
      %22 = dma.hbm_to_smem %s0, 16, [#allocation2], [#allocation5]
    $region5: #{tpu_custom_call.1} parent=1 // pred_fallthru
      _
    // Predicated region
    $region6: #{tpu_custom_call.1} parent=1 // pred_check
      _
    $region7: #{tpu_custom_call.1} parent=1 // pred_check_branch
      %24 = sbr.rel (0) target = $region9
    $region8: #{tpu_custom_call.1} parent=1 // pred_region
      _
    $region9: #{tpu_custom_call.1} parent=1 // pred_fallthru
      _
    // Predicated region
    $region10: #{tpu_custom_call.1} parent=1 // pred_check
      _
    $region11: #{tpu_custom_call.1} parent=1 // pred_check_branch
      %26 = sbr.rel (0) target = $region13
    $region12: #{tpu_custom_call.1} parent=1 // pred_region
      _
    $region13: #{tpu_custom_call.1} parent=1 // pred_fallthru
      _
    // Predicated region
    $region14: #{tpu_custom_call.1} parent=1 // pred_check
      _
    $region15: #{tpu_custom_call.1} parent=1 // pred_check_branch
      %28 = sbr.rel (0) target = $region17
    $region16: #{tpu_custom_call.1} parent=1 // pred_region
      %s30 = ssub.s32 2048, 2048
      %31 = vsyncadd [#allocation3], %s30
      %s32 = sshll.u32 [#allocation6], 4
      %s33 = int_to_ptr.vmem [resolvable:$true] %s32
      %38 = dma.hbm_to_vmem [thread:$0]  %s3, 2048, %s33, [#allocation3], 64, 64, 4
    $region17: #{tpu_custom_call.1} parent=1 // pred_fallthru
      _
    // Predicated region
    $region18: #{tpu_custom_call.1} parent=1 // pred_check
      _
    $region19: #{tpu_custom_call.1} parent=1 // pred_check_branch
      %40 = sbr.rel (0) target = $region21
    $region20: #{tpu_custom_call.1} parent=1 // pred_region
      %s42 = ssub.s32 1024, 1024
      %43 = vsyncadd [#allocation8], %s42
      %s44 = sshll.u32 [#allocation7], 4
      %s45 = int_to_ptr.vmem [resolvable:$true] %s44
      %50 = dma.hbm_to_vmem [thread:$0]  %s4, 1024, %s45, [#allocation8], 64, 64, 4
    $region21: #{tpu_custom_call.1} parent=1 // pred_fallthru
      _
    // Predicated region
    $region22: #{tpu_custom_call.1} parent=1 // pred_check
      _
    $region23: #{tpu_custom_call.1} parent=1 // pred_check_branch
      %52 = sbr.rel (0) target = $region25
    $region24: #{tpu_custom_call.1} parent=1 // pred_region
      _
    $region25: #{tpu_custom_call.1} parent=1 // pred_fallthru
      _
    // Predicated region
    $region26: #{tpu_custom_call.1} parent=1 // pred_check
      _
    $region27: #{tpu_custom_call.1} parent=1 // pred_check_branch
      %54 = sbr.rel (0) target = $region29
    $region28: #{tpu_custom_call.1} parent=1 // pred_region
      %55 = dma.done [#allocation5], 16
    $region29: #{tpu_custom_call.1} parent=1 // pred_fallthru
      _
    // Predicated region
    $region30: #{tpu_custom_call.1} parent=1 // pred_check
      _
    $region31: #{tpu_custom_call.1} parent=1 // pred_check_branch
      %57 = sbr.rel (0) target = $region33
    $region32: #{tpu_custom_call.1} parent=1 // pred_region
      %58 = dma.done [#allocation3], 2048
    $region33: #{tpu_custom_call.1} parent=1 // pred_fallthru
      _
    // Predicated region
    $region34: #{tpu_custom_call.1} parent=1 // pred_check
      _
    $region35: #{tpu_custom_call.1} parent=1 // pred_check_branch
      %60 = sbr.rel (0) target = $region37
    $region36: #{tpu_custom_call.1} parent=1 // pred_region
      %61 = dma.done [#allocation8], 1024
    $region37: #{tpu_custom_call.1} parent=1 // pred_fallthru
      _
    %62 = sfence
    %v64 = vld [vmem:[%s5] sm:$0x1]
    %v65 = vld [vmem:[%s1] sm:$0x3]
    %v66 = vld [vmem:[#allocation6] sm:$0xf]
    %v67 = vld [vmem:[#allocation6 + $0x4] sm:$0xf]
    %v68 = vld [vmem:[#allocation6 + $0x8] sm:$0xf]
    %v69 = vld [vmem:[#allocation6 + $0xc] sm:$0xf]
    %v70 = vld [vmem:[#allocation6 + $0x10] sm:$0xf]
    %v71 = vld [vmem:[#allocation6 + $0x14] sm:$0xf]
    %v72 = vld [vmem:[#allocation6 + $0x18] sm:$0xf]
    %v73 = vld [vmem:[#allocation6 + $0x1c] sm:$0xf]
    %v74 = vld [vmem:[#allocation6 + $0x20] sm:$0xf]
    %v75 = vld [vmem:[#allocation6 + $0x24] sm:$0xf]
    %v76 = vld [vmem:[#allocation6 + $0x28] sm:$0xf]
    %v77 = vld [vmem:[#allocation6 + $0x2c] sm:$0xf]
    %v78 = vld [vmem:[#allocation6 + $0x30] sm:$0xf]
    %v79 = vld [vmem:[#allocation6 + $0x34] sm:$0xf]
    %v80 = vld [vmem:[#allocation6 + $0x38] sm:$0xf]
    %v81 = vld [vmem:[#allocation6 + $0x3c] sm:$0xf]
    %v82 = vld [vmem:[#allocation6 + $0x40] sm:$0xf]
    %v83 = vld [vmem:[#allocation6 + $0x44] sm:$0xf]
    %v84 = vld [vmem:[#allocation6 + $0x48] sm:$0xf]
    %v85 = vld [vmem:[#allocation6 + $0x4c] sm:$0xf]
    %v86 = vld [vmem:[#allocation6 + $0x50] sm:$0xf]
    %v87 = vld [vmem:[#allocation6 + $0x54] sm:$0xf]
    %v88 = vld [vmem:[#allocation6 + $0x58] sm:$0xf]
    %v89 = vld [vmem:[#allocation6 + $0x5c] sm:$0xf]
    %v90 = vld [vmem:[#allocation6 + $0x60] sm:$0xf]
    %v91 = vld [vmem:[#allocation6 + $0x64] sm:$0xf]
    %v92 = vld [vmem:[#allocation6 + $0x68] sm:$0xf]
    %v93 = vld [vmem:[#allocation6 + $0x6c] sm:$0xf]
    %v94 = vld [vmem:[#allocation6 + $0x70] sm:$0xf]
    %v95 = vld [vmem:[#allocation6 + $0x74] sm:$0xf]
    %v96 = vld [vmem:[#allocation6 + $0x78] sm:$0xf]
    %v97 = vld [vmem:[#allocation6 + $0x7c] sm:$0xf]
    %v100 = vunpack.c.l.s4 1966171168
    %v101 = vunpack.c.0.s8 %v100
    %v102 = vlaneseq
    %v103 = vshrl.u32 %v102, 7
    %v104 = vsub.s32 %v101, %v103
    %v105 = vrot.slane %v65, %v104
    %v106 = vcombine.high %v105, %v105
    %v108 = vunpack.c.l.s4 1966171168
    %v109 = vunpack.c.0.s8 %v108
    %v110 = vlaneseq
    %v111 = vshrl.u32 %v110, 7
    %v112 = vsub.s32 %v109, %v111
    %v113 = vrot.slane %v105, %v112
    %v115 = vunpack.c.l.s4 1966171168
    %v116 = vunpack.c.0.s8 %v115
    %v117 = vlaneseq
    %v118 = vshrl.u32 %v117, 7
    %v119 = vsub.s32 %v116, %v118
    %v120 = vrot.slane %v106, %v119
    %v155 = vunpack.c.l.b16 %v66
    %v156 = vunpack.c.l.b16 %v67
    %v157 = vunpack.c.l.b16 %v68
    %v158 = vunpack.c.l.b16 %v69
    %v159 = vunpack.c.l.b16 %v70
    %v160 = vunpack.c.l.b16 %v71
    %v161 = vunpack.c.l.b16 %v72
    %v162 = vunpack.c.l.b16 %v73
    %v163 = vunpack.c.l.b16 %v74
    %v164 = vunpack.c.l.b16 %v75
    %v165 = vunpack.c.l.b16 %v76
    %v166 = vunpack.c.l.b16 %v77
    %v167 = vunpack.c.l.b16 %v78
    %v168 = vunpack.c.l.b16 %v79
    %v169 = vunpack.c.l.b16 %v80
    %v170 = vunpack.c.l.b16 %v81
    %v171 = vunpack.c.l.b16 %v82
    %v172 = vunpack.c.l.b16 %v83
    %v173 = vunpack.c.l.b16 %v84
    %v174 = vunpack.c.l.b16 %v85
    %v175 = vunpack.c.l.b16 %v86
    %v176 = vunpack.c.l.b16 %v87
    %v177 = vunpack.c.l.b16 %v88
    %v178 = vunpack.c.l.b16 %v89
    %v179 = vunpack.c.l.b16 %v90
    %v180 = vunpack.c.l.b16 %v91
    %v181 = vunpack.c.l.b16 %v92
    %v182 = vunpack.c.l.b16 %v93
    %v183 = vunpack.c.l.b16 %v94
    %v184 = vunpack.c.l.b16 %v95
    %v185 = vunpack.c.l.b16 %v96
    %v186 = vunpack.c.l.b16 %v97
    %v187 = vpack.c.b16 %v156, %v155
    %v188 = vpack.c.b16 %v158, %v157
    %v189 = vpack.c.b16 %v160, %v159
    %v190 = vpack.c.b16 %v162, %v161
    %v191 = vpack.c.b16 %v164, %v163
    %v192 = vpack.c.b16 %v166, %v165
    %v193 = vpack.c.b16 %v168, %v167
    %v194 = vpack.c.b16 %v170, %v169
    %v195 = vpack.c.b16 %v172, %v171
    %v196 = vpack.c.b16 %v174, %v173
    %v197 = vpack.c.b16 %v176, %v175
    %v198 = vpack.c.b16 %v178, %v177
    %v199 = vpack.c.b16 %v180, %v179
    %v200 = vpack.c.b16 %v182, %v181
    %v201 = vpack.c.b16 %v184, %v183
    %v202 = vpack.c.b16 %v186, %v185
    %219 = vmatprep.subr.bf16.mxu0 0
    %220 = vmatpush1.bf16.msra.mxu0 %v187
    %221 = vmatprep.subr.bf16.mxu0 0
    %222 = vmatpush1.bf16.msra.mxu0 %v188
    %223 = vmatprep.subr.bf16.mxu0 0
    %224 = vmatpush1.bf16.msra.mxu0 %v189
    %225 = vmatprep.subr.bf16.mxu0 0
    %226 = vmatpush1.bf16.msra.mxu0 %v190
    %227 = vmatprep.subr.bf16.mxu0 0
    %228 = vmatpush1.bf16.msra.mxu0 %v191
    %229 = vmatprep.subr.bf16.mxu0 0
    %230 = vmatpush1.bf16.msra.mxu0 %v192
    %231 = vmatprep.subr.bf16.mxu0 0
    %232 = vmatpush1.bf16.msra.mxu0 %v193
    %233 = vmatprep.subr.bf16.mxu0 0
    %234 = vmatpush1.bf16.msra.mxu0 %v194
    %235 = vmatprep.subr.bf16.mxu0 0
    %236 = vmatpush1.bf16.msra.mxu0 %v195
    %237 = vmatprep.subr.bf16.mxu0 0
    %238 = vmatpush1.bf16.msra.mxu0 %v196
    %239 = vmatprep.subr.bf16.mxu0 0
    %240 = vmatpush1.bf16.msra.mxu0 %v197
    %241 = vmatprep.subr.bf16.mxu0 0
    %242 = vmatpush1.bf16.msra.mxu0 %v198
    %243 = vmatprep.subr.bf16.mxu0 0
    %244 = vmatpush1.bf16.msra.mxu0 %v199
    %245 = vmatprep.subr.bf16.mxu0 0
    %246 = vmatpush1.bf16.msra.mxu0 %v200
    %247 = vmatprep.subr.bf16.mxu0 0
    %248 = vmatpush1.bf16.msra.mxu0 %v201
    %249 = vmatprep.subr.bf16.mxu0 0
    %250 = vmatpush1.bf16.msra.mxu0 %v202
    %251 = vmatprep.mubr.bf16.mxu0 %v120
    %252 = vmatmul.mubr.bf16.gmra.mrb[0].mxu0 %v113
    %v253 = vpop.f32.mrb[0].mxu0
    %v254 = vadd.f32 0.0, %v253
    %v255 = vpop.f32.mrb[0].mxu0
    %v256 = vpop.f32.mrb[0].mxu0
    %v257 = vpop.f32.mrb[0].mxu0
    %258 = vdwg.mxu0
    %v260 = vlaneseq
    %v261 = vshrl.u32 %v260, 7
    %v262 = vsub.s32 0, %v261
    %v263 = vrot.slane %v64, %v262
    %v265 = vadd.f32 %v263, %v254
    %v266 = vld [vmem:[%s2] sm:$0x1]
    %v267 = vld [vmem:[#allocation7] sm:$0xf]
    %v268 = vld [vmem:[#allocation7 + $0x4] sm:$0xf]
    %v269 = vld [vmem:[#allocation7 + $0x8] sm:$0xf]
    %v270 = vld [vmem:[#allocation7 + $0xc] sm:$0xf]
    %v271 = vld [vmem:[#allocation7 + $0x10] sm:$0xf]
    %v272 = vld [vmem:[#allocation7 + $0x14] sm:$0xf]
    %v273 = vld [vmem:[#allocation7 + $0x18] sm:$0xf]
    %v274 = vld [vmem:[#allocation7 + $0x1c] sm:$0xf]
    %v275 = vld [vmem:[#allocation7 + $0x20] sm:$0xf]
    %v276 = vld [vmem:[#allocation7 + $0x24] sm:$0xf]
    %v277 = vld [vmem:[#allocation7 + $0x28] sm:$0xf]
    %v278 = vld [vmem:[#allocation7 + $0x2c] sm:$0xf]
    %v279 = vld [vmem:[#allocation7 + $0x30] sm:$0xf]
    %v280 = vld [vmem:[#allocation7 + $0x34] sm:$0xf]
    %v281 = vld [vmem:[#allocation7 + $0x38] sm:$0xf]
    %v282 = vld [vmem:[#allocation7 + $0x3c] sm:$0xf]
    %v299 = vunpack.c.l.b16 %v267
    %v300 = vunpack.c.l.b16 %v268
    %v301 = vunpack.c.l.b16 %v269
    %v302 = vunpack.c.l.b16 %v270
    %v303 = vunpack.c.l.b16 %v271
    %v304 = vunpack.c.l.b16 %v272
    %v305 = vunpack.c.l.b16 %v273
    %v306 = vunpack.c.l.b16 %v274
    %v307 = vunpack.c.l.b16 %v275
    %v308 = vunpack.c.l.b16 %v276
    %v309 = vunpack.c.l.b16 %v277
    %v310 = vunpack.c.l.b16 %v278
    %v311 = vunpack.c.l.b16 %v279
    %v312 = vunpack.c.l.b16 %v280
    %v313 = vunpack.c.l.b16 %v281
    %v314 = vunpack.c.l.b16 %v282
    %v315 = vpack.c.b16 %v300, %v299
    %v316 = vpack.c.b16 %v302, %v301
    %v317 = vpack.c.b16 %v304, %v303
    %v318 = vpack.c.b16 %v306, %v305
    %v319 = vpack.c.b16 %v308, %v307
    %v320 = vpack.c.b16 %v310, %v309
    %v321 = vpack.c.b16 %v312, %v311
    %v322 = vpack.c.b16 %v314, %v313
    %331 = vmatprep.subr.bf16.mxu0 0
    %332 = vmatpush1.bf16.msra.mxu0 %v315
    %333 = vmatprep.subr.bf16.mxu0 0
    %334 = vmatpush1.bf16.msra.mxu0 %v316
    %335 = vmatprep.subr.bf16.mxu0 0
    %336 = vmatpush1.bf16.msra.mxu0 %v317
    %337 = vmatprep.subr.bf16.mxu0 0
    %338 = vmatpush1.bf16.msra.mxu0 %v318
    %339 = vmatprep.subr.bf16.mxu0 0
    %340 = vmatpush1.bf16.msra.mxu0 %v319
    %341 = vmatprep.subr.bf16.mxu0 0
    %342 = vmatpush1.bf16.msra.mxu0 %v320
    %343 = vmatprep.subr.bf16.mxu0 0
    %344 = vmatpush1.bf16.msra.mxu0 %v321
    %345 = vmatprep.subr.bf16.mxu0 0
    %346 = vmatpush1.bf16.msra.mxu0 %v322
    %347 = vmatprep.subr.bf16.mxu0 0
    %348 = vmatpush1.bf16.msra.mxu0 0
    %349 = vmatprep.subr.bf16.mxu0 0
    %350 = vmatpush1.bf16.msra.mxu0 0
    %351 = vmatprep.subr.bf16.mxu0 0
    %352 = vmatpush1.bf16.msra.mxu0 0
    %353 = vmatprep.subr.bf16.mxu0 0
    %354 = vmatpush1.bf16.msra.mxu0 0
    %355 = vmatprep.subr.bf16.mxu0 0
    %356 = vmatpush1.bf16.msra.mxu0 0
    %357 = vmatprep.subr.bf16.mxu0 0
    %358 = vmatpush1.bf16.msra.mxu0 0
    %359 = vmatprep.subr.bf16.mxu0 0
    %360 = vmatpush1.bf16.msra.mxu0 0
    %361 = vmatprep.subr.bf16.mxu0 0
    %362 = vmatpush1.bf16.msra.mxu0 0
    %363 = vmatprep.mubr.bf16.mxu0 0
    %364 = vmatmul.mubr.bf16.gmra.mrb[0].mxu0 %v266
    %v365 = vpop.f32.mrb[0].mxu0
    %v366 = vadd.f32 0.0, %v365
    %v367 = vpop.f32.mrb[0].mxu0
    %v368 = vpop.f32.mrb[0].mxu0
    %v369 = vpop.f32.mrb[0].mxu0
    %370 = vdwg.mxu0
    %v371 = vadd.f32 %v265, %v366
    %s372 = sld [smem:[#allocation2]]
    %s373 = sld [smem:[#allocation2 + $0x1]]
    %v374 = vxor.u32 %v371, 2147483648
    %v375 = vmul.f32 %v374, 1.442695
    %v376 = vpow.pop %v375
    %v377 = vadd.f32 %v376, 1.0
    %v378 = vrcp.pop %v377
    %v379 = vmul.f32 1.0, %v378
    %v380 = vstv %s372
    %v381 = vmul.f32 %v379, %v380
    %v382 = vstv %s373
    %v383 = vadd.f32 %v381, %v382
    %384 = vst [vmem:[#allocation9] sm:$0x3] %v383
    // Predicated region
    $region38: #{tpu_custom_call.1} parent=1 // pred_check
      _
    $region39: #{tpu_custom_call.1} parent=1 // pred_check_branch
      %386 = sbr.rel (0) target = $region41
    $region40: #{tpu_custom_call.1} parent=1 // pred_region
      %s388 = ssub.s32 32, 32
      %389 = vsyncadd [#allocation4], %s388
      %s391 = sshll.u32 [#allocation9], 4
      %s392 = int_to_ptr.vmem [resolvable:$true] %s391
      %394 = dma.vmem_to_hbm [thread:$0]  %s392, 32, %s6, [#allocation4]
    $region41: #{tpu_custom_call.1} parent=1 // pred_fallthru
      _
    // Predicated region
    $region42: #{tpu_custom_call.1} parent=1 // pred_check
      _
    $region43: #{tpu_custom_call.1} parent=1 // pred_check_branch
      %396 = sbr.rel (0) target = $region45
    $region44: #{tpu_custom_call.1} parent=1 // pred_region
      %397 = dma.done [#allocation4], 32
    $region45: #{tpu_custom_call.1} parent=1 // pred_fallthru
      _
    %398 = vsyncpa [#allocation3], 1
    %399 = vsyncpa [#allocation8], 1
    %400 = vsyncpa [#allocation4], 1
    %401 = vsyncpa [#allocation5], 1

</llo_original>
